<compile_context>
chip_gen: v7x
topology: tpu7x:2x2x1
jax: 0.10.0
libtpu: 0.0.40
codegen_flags: <defaults>
</compile_context>

<pallas_src>
import functools

import jax
import jax.numpy as jnp
from jax.experimental import pallas as pl
from jax.experimental.pallas import tpu as pltpu

LRELU_SLOPE = 0.2   # firewood LinearBlock 'lrelu' default negative slope


def _round_up(x, m):
    return (x + m - 1) // m * m


def _lrelu(x):
    return jnp.where(x > 0, x, LRELU_SLOPE * x)


def generator_kernel(x_ref,
                     w1_ref, b1_ref,
                     w2_ref, b2_ref,
                     w3_ref, b3_ref,
                     w4_ref, b4_ref,
                     out_ref):
    """Fused 4-layer MLP on one batch tile: (lrelu o linear) x3 -> tanh o linear.

    MXU operands are bf16 (activations cast at the dot input, weights stored
    bf16), accumulation is f32; bias add / LeakyReLU / tanh run in f32 on the
    VPU/EUP (safe on v5e which has no bf16 elementwise path). The result is
    stored as bf16.
    """
    bf16 = jnp.bfloat16
    h = x_ref[...]
    h = _lrelu(jnp.dot(h.astype(bf16), w1_ref[...],
                       preferred_element_type=jnp.float32) + b1_ref[...])
    h = _lrelu(jnp.dot(h.astype(bf16), w2_ref[...],
                       preferred_element_type=jnp.float32) + b2_ref[...])
    h = _lrelu(jnp.dot(h.astype(bf16), w3_ref[...],
                       preferred_element_type=jnp.float32) + b3_ref[...])
    h = jnp.dot(h.astype(bf16), w4_ref[...],
                preferred_element_type=jnp.float32) + b4_ref[...]
    out_ref[...] = jnp.tanh(h).astype(out_ref.dtype)


def init_params(key, latent_dim, hidden_dims, out_dim, dtype=jnp.float32):
    """Deterministic params mimicking torch.nn.Linear default init
    (uniform in +-1/sqrt(fan_in)). Weights stored [in, out] so the kernel
    computes x @ W + b (== x @ W_torch.T + b)."""
    dims = [latent_dim, *hidden_dims, out_dim]
    params = []
    for i in range(len(dims) - 1):
        fan_in, fan_out = dims[i], dims[i + 1]
        key, kw, kb = jax.random.split(key, 3)
        bound = float(fan_in) ** -0.5
        w = jax.random.uniform(kw, (fan_in, fan_out), dtype, -bound, bound)
        b = jax.random.uniform(kb, (1, fan_out), dtype, -bound, bound)
        params.append((w, b))
    return params


def prepare_params(params):
    """Kernel-format params: bf16 weights (MXU operands / half HBM traffic),
    f32 biases (added to the f32 accumulator)."""
    return [(w.astype(jnp.bfloat16), b.astype(jnp.float32))
            for (w, b) in params]


@functools.partial(jax.jit,
                   static_argnames=("channels", "resolution", "batch_block"))
def generator_forward(z, kernel_params, *, channels=1, resolution=(28, 28),
                      batch_block=512):
    """z: [B, latent_dim] -> image [B, C, H, W] (NCHW, like PyTorch), bf16."""
    batch, latent_dim = z.shape
    out_dim = channels * resolution[0] * resolution[1]

    # Batch tiling: block rows (multiple of 8), pad ragged batches.
    min_rows = _round_up(batch, 8)
    bb = min(batch_block, min_rows)
    # v7x: guarantee >= 2 grid steps when there is enough work so the
    # "parallel" batch axis spans both TensorCores (no-op on v5e/v6e).
    if min_rows >= 16 and min_rows // bb < 2:
        bb = _round_up((min_rows + 1) // 2, 8)
    padded_batch = _round_up(batch, bb)
    if padded_batch != batch:
        z = jnp.pad(z, ((0, padded_batch - batch), (0, 0)))

    flat_args = [z]
    in_specs = [pl.BlockSpec((bb, latent_dim), lambda i: (i, 0))]
    for w, b in kernel_params:
        flat_args.extend((w, b))
        # Constant block index -> weights/biases fetched once, VMEM-resident
        # across all batch grid steps.
        in_specs.append(pl.BlockSpec(w.shape, lambda i: (0, 0)))
        in_specs.append(pl.BlockSpec(b.shape, lambda i: (0, 0)))
    # Output width is exactly out_dim (block last dim == full array dim is
    # legal): no lane padding, no post-kernel slice copy.
    out_spec = pl.BlockSpec((bb, out_dim), lambda i: (i, 0))

    flat = pl.pallas_call(
        generator_kernel,
        out_shape=jax.ShapeDtypeStruct((padded_batch, out_dim),
                                       jnp.bfloat16),
        grid=(padded_batch // bb,),
        in_specs=in_specs,
        out_specs=out_spec,
        compiler_params=pltpu.CompilerParams(
            dimension_semantics=("parallel",)),
    )(*flat_args)

    if padded_batch != batch:
        flat = flat[:batch]
    # Reshape(image_shape) glue (matches the PyTorch layers.Reshape); this is
    # a metadata-only reshape (no transpose).
    return flat.reshape(batch, channels, *resolution)


def reference_forward(z, kernel_params):
    """Pure-JAX reference mirroring the kernel numerics (bf16 MXU operands,
    f32 accumulation / elementwise), returning f32."""
    h = z
    n = len(kernel_params)
    for i, (w, b) in enumerate(kernel_params):
        h = jnp.dot(h.astype(jnp.bfloat16), w,
                    preferred_element_type=jnp.float32) + b
        h = jnp.tanh(h) if i == n - 1 else _lrelu(h)
    return h


if __name__ == "__main__":
    latent_dim = 32
    channels = 1
    resolution = (28, 28)
    hidden_dims = (128, 256, 256)
    out_dim = channels * resolution[0] * resolution[1]     # 784

    key = jax.random.PRNGKey(0)
    key_z, key_p = jax.random.split(key)
    params = init_params(key_p, latent_dim, hidden_dims, out_dim)
    kparams = prepare_params(params)

    # Small serving-style batch (single grid step).
    batch = 8
    z = jax.random.normal(key_z, (batch, latent_dim), jnp.float32)
    img = generator_forward(z, kparams, channels=channels,
                            resolution=resolution)
    img = jax.block_until_ready(img)
    assert img.shape == (batch, channels, *resolution), img.shape
    assert img.dtype == jnp.bfloat16, img.dtype
    ref = reference_forward(z, kparams).reshape(batch, channels, *resolution)
    err = float(jnp.max(jnp.abs(img.astype(jnp.float32) - ref)))
    assert err < 2e-2, err

    # Larger ragged batch exercising the 2-step grid split + pad/slice path.
    batch2 = 300
    z2 = jax.random.normal(key_z, (batch2, latent_dim), jnp.float32)
    img2 = generator_forward(z2, kparams, channels=channels,
                             resolution=resolution, batch_block=512)
    img2 = jax.block_until_ready(img2)
    assert img2.shape == (batch2, channels, *resolution), img2.shape
    ref2 = reference_forward(z2, kparams).reshape(
        batch2, channels, *resolution)
    err2 = float(jnp.max(jnp.abs(img2.astype(jnp.float32) - ref2)))
    assert err2 < 2e-2, err2

    print("KERNEL_OK")
</pallas_src>

<mosaic_0001>
module attributes {stable_mosaic.version = 11 : i64} {
  func.func @generator_kernel(%arg0: i32, %arg1: memref<8x32xf32, #tpu.memory_space<vmem>>, %arg2: memref<32x128xbf16, #tpu.memory_space<vmem>>, %arg3: memref<1x128xf32, #tpu.memory_space<vmem>>, %arg4: memref<128x256xbf16, #tpu.memory_space<vmem>>, %arg5: memref<1x256xf32, #tpu.memory_space<vmem>>, %arg6: memref<256x256xbf16, #tpu.memory_space<vmem>>, %arg7: memref<1x256xf32, #tpu.memory_space<vmem>>, %arg8: memref<256x784xbf16, #tpu.memory_space<vmem>>, %arg9: memref<1x784xf32, #tpu.memory_space<vmem>>, %arg10: memref<8x784xbf16, #tpu.memory_space<vmem>>) attributes {dimension_semantics = [#tpu.dimension_semantics<parallel>], iteration_bounds = array<i64: 1>, scalar_prefetch = 0 : i64, scratch_operands = 0 : i64, tpu.core_type = #tpu.core_type<tc>, window_params = [{transform_indices = @transform_0, window_bounds = array<i64: 8, 32>}, {pipeline_mode = #tpu.pipeline_mode<synchronous>, transform_indices = @transform_1, window_bounds = array<i64: 32, 128>}, {pipeline_mode = #tpu.pipeline_mode<synchronous>, transform_indices = @transform_2, window_bounds = array<i64: 1, 128>}, {pipeline_mode = #tpu.pipeline_mode<synchronous>, transform_indices = @transform_3, window_bounds = array<i64: 128, 256>}, {pipeline_mode = #tpu.pipeline_mode<synchronous>, transform_indices = @transform_4, window_bounds = array<i64: 1, 256>}, {pipeline_mode = #tpu.pipeline_mode<synchronous>, transform_indices = @transform_5, window_bounds = array<i64: 256, 256>}, {pipeline_mode = #tpu.pipeline_mode<synchronous>, transform_indices = @transform_6, window_bounds = array<i64: 1, 256>}, {pipeline_mode = #tpu.pipeline_mode<synchronous>, transform_indices = @transform_7, window_bounds = array<i64: 256, 784>}, {pipeline_mode = #tpu.pipeline_mode<synchronous>, transform_indices = @transform_8, window_bounds = array<i64: 1, 784>}, {transform_indices = @transform_9, window_bounds = array<i64: 8, 784>}]} {
    %c0 = arith.constant 0 : index
    %c0_0 = arith.constant 0 : index
    %0 = vector.load %arg1[%c0, %c0_0] : memref<8x32xf32, #tpu.memory_space<vmem>>, vector<8x32xf32>
    %1 = arith.truncf %0 : vector<8x32xf32> to vector<8x32xbf16>
    %c0_1 = arith.constant 0 : index
    %c0_2 = arith.constant 0 : index
    %2 = vector.load %arg2[%c0_1, %c0_2] : memref<32x128xbf16, #tpu.memory_space<vmem>>, vector<32x128xbf16>
    %cst = arith.constant dense<0.000000e+00> : vector<8x128xf32>
    %3 = tpu.matmul %1, %2, %cst {dimension_numbers = #tpu.dot_dimension_numbers<[1], [0], [0], [1], [0, 0, 1, 1], [], []>} : vector<8x32xbf16>, vector<32x128xbf16>, vector<8x128xf32> -> vector<8x128xf32>
    %c0_3 = arith.constant 0 : index
    %c0_4 = arith.constant 0 : index
    %4 = vector.load %arg3[%c0_3, %c0_4] : memref<1x128xf32, #tpu.memory_space<vmem>>, vector<1x128xf32>
    %5 = vector.broadcast %4 : vector<1x128xf32> to vector<8x128xf32>
    %6 = arith.addf %3, %5 : vector<8x128xf32>
    %cst_5 = arith.constant 0.000000e+00 : f32
    %7 = vector.broadcast %cst_5 : f32 to vector<8x128xf32>
    %8 = arith.cmpf ogt, %6, %7 : vector<8x128xf32>
    %cst_6 = arith.constant 2.000000e-01 : f32
    %9 = vector.broadcast %cst_6 : f32 to vector<8x128xf32>
    %10 = arith.mulf %9, %6 : vector<8x128xf32>
    %11 = arith.select %8, %6, %10 : vector<8x128xi1>, vector<8x128xf32>
    %12 = arith.truncf %11 : vector<8x128xf32> to vector<8x128xbf16>
    %c0_7 = arith.constant 0 : index
    %c0_8 = arith.constant 0 : index
    %13 = vector.load %arg4[%c0_7, %c0_8] : memref<128x256xbf16, #tpu.memory_space<vmem>>, vector<128x256xbf16>
    %cst_9 = arith.constant dense<0.000000e+00> : vector<8x256xf32>
    %14 = tpu.matmul %12, %13, %cst_9 {dimension_numbers = #tpu.dot_dimension_numbers<[1], [0], [0], [1], [0, 0, 1, 1], [], []>} : vector<8x128xbf16>, vector<128x256xbf16>, vector<8x256xf32> -> vector<8x256xf32>
    %c0_10 = arith.constant 0 : index
    %c0_11 = arith.constant 0 : index
    %15 = vector.load %arg5[%c0_10, %c0_11] : memref<1x256xf32, #tpu.memory_space<vmem>>, vector<1x256xf32>
    %16 = vector.broadcast %15 : vector<1x256xf32> to vector<8x256xf32>
    %17 = arith.addf %14, %16 : vector<8x256xf32>
    %cst_12 = arith.constant 0.000000e+00 : f32
    %18 = vector.broadcast %cst_12 : f32 to vector<8x256xf32>
    %19 = arith.cmpf ogt, %17, %18 : vector<8x256xf32>
    %cst_13 = arith.constant 2.000000e-01 : f32
    %20 = vector.broadcast %cst_13 : f32 to vector<8x256xf32>
    %21 = arith.mulf %20, %17 : vector<8x256xf32>
    %22 = arith.select %19, %17, %21 : vector<8x256xi1>, vector<8x256xf32>
    %23 = arith.truncf %22 : vector<8x256xf32> to vector<8x256xbf16>
    %c0_14 = arith.constant 0 : index
    %c0_15 = arith.constant 0 : index
    %24 = vector.load %arg6[%c0_14, %c0_15] : memref<256x256xbf16, #tpu.memory_space<vmem>>, vector<256x256xbf16>
    %cst_16 = arith.constant dense<0.000000e+00> : vector<8x256xf32>
    %25 = tpu.matmul %23, %24, %cst_16 {dimension_numbers = #tpu.dot_dimension_numbers<[1], [0], [0], [1], [0, 0, 1, 1], [], []>} : vector<8x256xbf16>, vector<256x256xbf16>, vector<8x256xf32> -> vector<8x256xf32>
    %c0_17 = arith.constant 0 : index
    %c0_18 = arith.constant 0 : index
    %26 = vector.load %arg7[%c0_17, %c0_18] : memref<1x256xf32, #tpu.memory_space<vmem>>, vector<1x256xf32>
    %27 = vector.broadcast %26 : vector<1x256xf32> to vector<8x256xf32>
    %28 = arith.addf %25, %27 : vector<8x256xf32>
    %cst_19 = arith.constant 0.000000e+00 : f32
    %29 = vector.broadcast %cst_19 : f32 to vector<8x256xf32>
    %30 = arith.cmpf ogt, %28, %29 : vector<8x256xf32>
    %cst_20 = arith.constant 2.000000e-01 : f32
    %31 = vector.broadcast %cst_20 : f32 to vector<8x256xf32>
    %32 = arith.mulf %31, %28 : vector<8x256xf32>
    %33 = arith.select %30, %28, %32 : vector<8x256xi1>, vector<8x256xf32>
    %34 = arith.truncf %33 : vector<8x256xf32> to vector<8x256xbf16>
    %c0_21 = arith.constant 0 : index
    %c0_22 = arith.constant 0 : index
    %35 = vector.load %arg8[%c0_21, %c0_22] : memref<256x784xbf16, #tpu.memory_space<vmem>>, vector<256x784xbf16>
    %cst_23 = arith.constant dense<0.000000e+00> : vector<8x784xf32>
    %36 = tpu.matmul %34, %35, %cst_23 {dimension_numbers = #tpu.dot_dimension_numbers<[1], [0], [0], [1], [0, 0, 1, 1], [], []>} : vector<8x256xbf16>, vector<256x784xbf16>, vector<8x784xf32> -> vector<8x784xf32>
    %c0_24 = arith.constant 0 : index
    %c0_25 = arith.constant 0 : index
    %37 = vector.load %arg9[%c0_24, %c0_25] : memref<1x784xf32, #tpu.memory_space<vmem>>, vector<1x784xf32>
    %38 = vector.broadcast %37 : vector<1x784xf32> to vector<8x784xf32>
    %39 = arith.addf %36, %38 : vector<8x784xf32>
    %40 = math.tanh %39 : vector<8x784xf32>
    %41 = arith.truncf %40 : vector<8x784xf32> to vector<8x784xbf16>
    %c0_26 = arith.constant 0 : index
    %c0_27 = arith.constant 0 : index
    %42 = vector.load %arg10[%c0_26, %c0_27] : memref<8x784xbf16, #tpu.memory_space<vmem>>, vector<8x784xbf16>
    tpu.vector_store %arg10[%c0_26, %c0_27], %41 {strides = array<i32>} : memref<8x784xbf16, #tpu.memory_space<vmem>>, vector<8x784xbf16>,
    return
  }
  func.func @transform_0(%arg0: i32) -> (i32, i32) {
    %c0_i32 = arith.constant 0 : i32
    %c0_i32_0 = arith.constant 0 : i32
    return %arg0, %c0_i32 : i32, i32
  }
  func.func @transform_1(%arg0: i32) -> (i32, i32) {
    %c0_i32 = arith.constant 0 : i32
    %c0_i32_0 = arith.constant 0 : i32
    %c0_i32_1 = arith.constant 0 : i32
    return %c0_i32, %c0_i32_0 : i32, i32
  }
  func.func @transform_2(%arg0: i32) -> (i32, i32) {
    %c0_i32 = arith.constant 0 : i32
    %c0_i32_0 = arith.constant 0 : i32
    %c0_i32_1 = arith.constant 0 : i32
    return %c0_i32, %c0_i32_0 : i32, i32
  }
  func.func @transform_3(%arg0: i32) -> (i32, i32) {
    %c0_i32 = arith.constant 0 : i32
    %c0_i32_0 = arith.constant 0 : i32
    %c0_i32_1 = arith.constant 0 : i32
    return %c0_i32, %c0_i32_0 : i32, i32
  }
  func.func @transform_4(%arg0: i32) -> (i32, i32) {
    %c0_i32 = arith.constant 0 : i32
    %c0_i32_0 = arith.constant 0 : i32
    %c0_i32_1 = arith.constant 0 : i32
    return %c0_i32, %c0_i32_0 : i32, i32
  }
  func.func @transform_5(%arg0: i32) -> (i32, i32) {
    %c0_i32 = arith.constant 0 : i32
    %c0_i32_0 = arith.constant 0 : i32
    %c0_i32_1 = arith.constant 0 : i32
    return %c0_i32, %c0_i32_0 : i32, i32
  }
  func.func @transform_6(%arg0: i32) -> (i32, i32) {
    %c0_i32 = arith.constant 0 : i32
    %c0_i32_0 = arith.constant 0 : i32
    %c0_i32_1 = arith.constant 0 : i32
    return %c0_i32, %c0_i32_0 : i32, i32
  }
  func.func @transform_7(%arg0: i32) -> (i32, i32) {
    %c0_i32 = arith.constant 0 : i32
    %c0_i32_0 = arith.constant 0 : i32
    %c0_i32_1 = arith.constant 0 : i32
    return %c0_i32, %c0_i32_0 : i32, i32
  }
  func.func @transform_8(%arg0: i32) -> (i32, i32) {
    %c0_i32 = arith.constant 0 : i32
    %c0_i32_0 = arith.constant 0 : i32
    %c0_i32_1 = arith.constant 0 : i32
    return %c0_i32, %c0_i32_0 : i32, i32
  }
  func.func @transform_9(%arg0: i32) -> (i32, i32) {
    %c0_i32 = arith.constant 0 : i32
    %c0_i32_0 = arith.constant 0 : i32
    return %arg0, %c0_i32 : i32, i32
  }
}

</mosaic_0001>

<llo_original>
// kernel: generator_forward.1
$region0: #{generator_forward.1}
  #allocation0 [shape = 'u32[]', space=smem, size = 0x4, offset = 0x4, fixed_abs, tag = 'smem constant byte address 0x4 - core index']
  #allocation1 [shape = 'u32[144,128]{1,0:T(1,128)}', space=vmem, size = 0x12000, scoped, tag = 'internal scratch']
  %s0 = inlined_call_operand.vmem [shape: f32[8,32], index: 0, kind: input, shape index: {}]
  %s1 = inlined_call_operand.vmem [shape: bf16[32,128], index: 1, kind: input, shape index: {}]
  %s2 = inlined_call_operand.vmem [shape: f32[1,128], index: 2, kind: input, shape index: {}]
  %s3 = inlined_call_operand.vmem [shape: bf16[128,256], index: 3, kind: input, shape index: {}]
  %s4 = inlined_call_operand.vmem [shape: f32[1,256], index: 4, kind: input, shape index: {}]
  %s5 = inlined_call_operand.vmem [shape: bf16[256,256], index: 5, kind: input, shape index: {}]
  %s6 = inlined_call_operand.vmem [shape: f32[1,256], index: 6, kind: input, shape index: {}]
  %s7 = inlined_call_operand.vmem [shape: bf16[256,784], index: 7, kind: input, shape index: {}]
  %s8 = inlined_call_operand.vmem [shape: f32[1,784], index: 8, kind: input, shape index: {}]
  %s9 = inlined_call_operand.vmem [shape: bf16[8,784], index: 9, kind: output, shape index: {}]
  %s10 = sld [smem:[#allocation0]]
  $region46: #{generator_forward.1} parent=0
    _
  %s12 = ssub.s32 1, %s10
  %s13 = scalar_select 0, %s12, %s10
  // Predicated region
  $region2: #{generator_forward.1} parent=0 // pred_check
    _
  $region3: #{generator_forward.1} parent=0 // pred_check_branch
    %15 = sbr.rel (0) target = $region5
  $region4: #{generator_forward.1} parent=0 // pred_region
    _
  $region5: #{generator_forward.1} parent=0 // pred_fallthru
    _
  // Predicated region
  $region6: #{generator_forward.1} parent=0 // pred_check
    _
  $region7: #{generator_forward.1} parent=0 // pred_check_branch
    %17 = sbr.rel (0) target = $region9
  $region8: #{generator_forward.1} parent=0 // pred_region
    _
  $region9: #{generator_forward.1} parent=0 // pred_fallthru
    _
  // Predicated region
  $region10: #{generator_forward.1} parent=0 // pred_check
    _
  $region11: #{generator_forward.1} parent=0 // pred_check_branch
    %19 = sbr.rel (0) target = $region13
  $region12: #{generator_forward.1} parent=0 // pred_region
    _
  $region13: #{generator_forward.1} parent=0 // pred_fallthru
    _
  // Predicated region
  $region14: #{generator_forward.1} parent=0 // pred_check
    _
  $region15: #{generator_forward.1} parent=0 // pred_check_branch
    %21 = sbr.rel (0) target = $region17
  $region16: #{generator_forward.1} parent=0 // pred_region
    _
  $region17: #{generator_forward.1} parent=0 // pred_fallthru
    _
  // Predicated region
  $region18: #{generator_forward.1} parent=0 // pred_check
    _
  $region19: #{generator_forward.1} parent=0 // pred_check_branch
    %23 = sbr.rel (0) target = $region21
  $region20: #{generator_forward.1} parent=0 // pred_region
    _
  $region21: #{generator_forward.1} parent=0 // pred_fallthru
    _
  // Predicated region
  $region22: #{generator_forward.1} parent=0 // pred_check
    _
  $region23: #{generator_forward.1} parent=0 // pred_check_branch
    %25 = sbr.rel (0) target = $region25
  $region24: #{generator_forward.1} parent=0 // pred_region
    _
  $region25: #{generator_forward.1} parent=0 // pred_fallthru
    _
  // Predicated region
  $region26: #{generator_forward.1} parent=0 // pred_check
    _
  $region27: #{generator_forward.1} parent=0 // pred_check_branch
    %27 = sbr.rel (0) target = $region29
  $region28: #{generator_forward.1} parent=0 // pred_region
    _
  $region29: #{generator_forward.1} parent=0 // pred_fallthru
    _
  // Predicated region
  $region30: #{generator_forward.1} parent=0 // pred_check
    _
  $region31: #{generator_forward.1} parent=0 // pred_check_branch
    %29 = sbr.rel (0) target = $region33
  $region32: #{generator_forward.1} parent=0 // pred_region
    _
  $region33: #{generator_forward.1} parent=0 // pred_fallthru
    _
  // Predicated region
  $region34: #{generator_forward.1} parent=0 // pred_check
    _
  $region35: #{generator_forward.1} parent=0 // pred_check_branch
    %31 = sbr.rel (0) target = $region37
  $region36: #{generator_forward.1} parent=0 // pred_region
    _
  $region37: #{generator_forward.1} parent=0 // pred_fallthru
    _
  %v33 = vld [vmem:[%s0] sm:$0xff]
  %v34 = vpack.c.bf16 %v33, %v33
  %v35 = vld [vmem:[%s1] sm:$0xf]
  %v36 = vld [vmem:[%s1 + $0x4] sm:$0xf]
  %v37 = vld [vmem:[%s1 + $0x8] sm:$0xf]
  %v38 = vld [vmem:[%s1 + $0xc] sm:$0xf]
  %v39 = vld [vmem:[%s2] sm:$0x1]
  %v41 = vlaneseq
  %v42 = vshrl.u32 %v41, 7
  %v43 = vsub.s32 0, %v42
  %v44 = vrot.slane %v39, %v43
  %v50 = vunpack.c.l.b16 %v35
  %v51 = vunpack.c.l.b16 %v36
  %v52 = vunpack.c.l.b16 %v37
  %v53 = vunpack.c.l.b16 %v38
  %v54 = vpack.c.b16 %v51, %v50
  %v55 = vpack.c.b16 %v53, %v52
  %vm58 = vcmask 261120
  %v60 = vsel %vm58, %v34, 0
  %62 = vmatprep.subr.bf16.mxu0 0
  %63 = vmatpush1.bf16.msra.mxu0 %v54
  %64 = vmatprep.subr.bf16.mxu0 0
  %65 = vmatpush1.bf16.msra.mxu0 %v55
  %66 = vmatprep.subr.bf16.mxu0 0
  %67 = vmatpush1.bf16.msra.mxu0 0
  %68 = vmatprep.subr.bf16.mxu0 0
  %69 = vmatpush1.bf16.msra.mxu0 0
  %70 = vmatprep.subr.bf16.mxu0 0
  %71 = vmatpush1.bf16.msra.mxu0 0
  %72 = vmatprep.subr.bf16.mxu0 0
  %73 = vmatpush1.bf16.msra.mxu0 0
  %74 = vmatprep.subr.bf16.mxu0 0
  %75 = vmatpush1.bf16.msra.mxu0 0
  %76 = vmatprep.subr.bf16.mxu0 0
  %77 = vmatpush1.bf16.msra.mxu0 0
  %78 = vmatprep.subr.bf16.mxu0 0
  %79 = vmatpush1.bf16.msra.mxu0 0
  %80 = vmatprep.subr.bf16.mxu0 0
  %81 = vmatpush1.bf16.msra.mxu0 0
  %82 = vmatprep.subr.bf16.mxu0 0
  %83 = vmatpush1.bf16.msra.mxu0 0
  %84 = vmatprep.subr.bf16.mxu0 0
  %85 = vmatpush1.bf16.msra.mxu0 0
  %86 = vmatprep.subr.bf16.mxu0 0
  %87 = vmatpush1.bf16.msra.mxu0 0
  %88 = vmatprep.subr.bf16.mxu0 0
  %89 = vmatpush1.bf16.msra.mxu0 0
  %90 = vmatprep.subr.bf16.mxu0 0
  %91 = vmatpush1.bf16.msra.mxu0 0
  %92 = vmatprep.subr.bf16.mxu0 0
  %93 = vmatpush1.bf16.msra.mxu0 0
  %94 = vmatprep.mubr.bf16.mxu0 0
  %95 = vmatmul.mubr.bf16.gmra.mrb[0].mxu0 %v60
  %v96 = vpop.f32.mrb[0].mxu0
  %v97 = vadd.f32 %v44, %v96
  %v98 = vpop.f32.mrb[0].mxu0
  %v99 = vpop.f32.mrb[0].mxu0
  %v100 = vpop.f32.mrb[0].mxu0
  %101 = vdwg.mxu0
  %vm102 = vcmp.gt.f32.partialorder %v97, 0.0
  %v103 = vmul.f32 %v97, 0.2
  %v104 = vsel %vm102, %v97, %v103
  %v105 = vpack.c.bf16 %v104, %v104
  %v106 = vld [vmem:[%s3] sm:$0xff]
  %v107 = vld [vmem:[%s3 + $0x8] sm:$0xff]
  %v108 = vld [vmem:[%s3 + $0x10] sm:$0xff]
  %v109 = vld [vmem:[%s3 + $0x18] sm:$0xff]
  %v110 = vld [vmem:[%s3 + $0x20] sm:$0xff]
  %v111 = vld [vmem:[%s3 + $0x28] sm:$0xff]
  %v112 = vld [vmem:[%s3 + $0x30] sm:$0xff]
  %v113 = vld [vmem:[%s3 + $0x38] sm:$0xff]
  %v114 = vld [vmem:[%s3 + $0x40] sm:$0xff]
  %v115 = vld [vmem:[%s3 + $0x48] sm:$0xff]
  %v116 = vld [vmem:[%s3 + $0x50] sm:$0xff]
  %v117 = vld [vmem:[%s3 + $0x58] sm:$0xff]
  %v118 = vld [vmem:[%s3 + $0x60] sm:$0xff]
  %v119 = vld [vmem:[%s3 + $0x68] sm:$0xff]
  %v120 = vld [vmem:[%s3 + $0x70] sm:$0xff]
  %v121 = vld [vmem:[%s3 + $0x78] sm:$0xff]
  %v122 = vld [vmem:[%s4] sm:$0x3]
  %v124 = vlaneseq
  %v125 = vshrl.u32 %v124, 7
  %v126 = vsub.s32 0, %v125
  %v127 = vrot.slane %v122, %v126
  %v128 = vlaneseq
  %v129 = vshrl.u32 %v128, 7
  %v130 = vsub.s32 1, %v129
  %v131 = vrot.slane %v122, %v130
  %v150 = vunpack.c.l.b16 %v106
  %v151 = vunpack.c.h.b16 %v106
  %v152 = vunpack.c.l.b16 %v107
  %v153 = vunpack.c.h.b16 %v107
  %v154 = vunpack.c.l.b16 %v108
  %v155 = vunpack.c.h.b16 %v108
  %v156 = vunpack.c.l.b16 %v109
  %v157 = vunpack.c.h.b16 %v109
  %v158 = vunpack.c.l.b16 %v110
  %v159 = vunpack.c.h.b16 %v110
  %v160 = vunpack.c.l.b16 %v111
  %v161 = vunpack.c.h.b16 %v111
  %v162 = vunpack.c.l.b16 %v112
  %v163 = vunpack.c.h.b16 %v112
  %v164 = vunpack.c.l.b16 %v113
  %v165 = vunpack.c.h.b16 %v113
  %v166 = vunpack.c.l.b16 %v114
  %v167 = vunpack.c.h.b16 %v114
  %v168 = vunpack.c.l.b16 %v115
  %v169 = vunpack.c.h.b16 %v115
  %v170 = vunpack.c.l.b16 %v116
  %v171 = vunpack.c.h.b16 %v116
  %v172 = vunpack.c.l.b16 %v117
  %v173 = vunpack.c.h.b16 %v117
  %v174 = vunpack.c.l.b16 %v118
  %v175 = vunpack.c.h.b16 %v118
  %v176 = vunpack.c.l.b16 %v119
  %v177 = vunpack.c.h.b16 %v119
  %v178 = vunpack.c.l.b16 %v120
  %v179 = vunpack.c.h.b16 %v120
  %v180 = vunpack.c.l.b16 %v121
  %v181 = vunpack.c.h.b16 %v121
  %v182 = vpack.c.b16 %v152, %v150
  %v183 = vpack.c.b16 %v153, %v151
  %v184 = vpack.c.b16 %v156, %v154
  %v185 = vpack.c.b16 %v157, %v155
  %v186 = vpack.c.b16 %v160, %v158
  %v187 = vpack.c.b16 %v161, %v159
  %v188 = vpack.c.b16 %v164, %v162
  %v189 = vpack.c.b16 %v165, %v163
  %v190 = vpack.c.b16 %v168, %v166
  %v191 = vpack.c.b16 %v169, %v167
  %v192 = vpack.c.b16 %v172, %v170
  %v193 = vpack.c.b16 %v173, %v171
  %v194 = vpack.c.b16 %v176, %v174
  %v195 = vpack.c.b16 %v177, %v175
  %v196 = vpack.c.b16 %v180, %v178
  %v197 = vpack.c.b16 %v181, %v179
  %214 = vmatprep.subr.bf16.mxu0 %v183
  %215 = vmatpush1.bf16.msra.mxu0 %v182
  %216 = vmatprep.subr.bf16.mxu0 %v185
  %217 = vmatpush1.bf16.msra.mxu0 %v184
  %218 = vmatprep.subr.bf16.mxu0 %v187
  %219 = vmatpush1.bf16.msra.mxu0 %v186
  %220 = vmatprep.subr.bf16.mxu0 %v189
  %221 = vmatpush1.bf16.msra.mxu0 %v188
  %222 = vmatprep.subr.bf16.mxu0 %v191
  %223 = vmatpush1.bf16.msra.mxu0 %v190
  %224 = vmatprep.subr.bf16.mxu0 %v193
  %225 = vmatpush1.bf16.msra.mxu0 %v192
  %226 = vmatprep.subr.bf16.mxu0 %v195
  %227 = vmatpush1.bf16.msra.mxu0 %v194
  %228 = vmatprep.subr.bf16.mxu0 %v197
  %229 = vmatpush1.bf16.msra.mxu0 %v196
  %230 = vmatprep.subr.bf16.mxu0 0
  %231 = vmatpush1.bf16.msra.mxu0 0
  %232 = vmatprep.subr.bf16.mxu0 0
  %233 = vmatpush1.bf16.msra.mxu0 0
  %234 = vmatprep.subr.bf16.mxu0 0
  %235 = vmatpush1.bf16.msra.mxu0 0
  %236 = vmatprep.subr.bf16.mxu0 0
  %237 = vmatpush1.bf16.msra.mxu0 0
  %238 = vmatprep.subr.bf16.mxu0 0
  %239 = vmatpush1.bf16.msra.mxu0 0
  %240 = vmatprep.subr.bf16.mxu0 0
  %241 = vmatpush1.bf16.msra.mxu0 0
  %242 = vmatprep.subr.bf16.mxu0 0
  %243 = vmatpush1.bf16.msra.mxu0 0
  %244 = vmatprep.subr.bf16.mxu0 0
  %245 = vmatpush1.bf16.msra.mxu0 0
  %246 = vmatprep.mubr.bf16.mxu0 0
  %247 = vmatmul.mubr.bf16.gmra.mrb[0].mxu0 %v105
  %v248 = vpop.f32.mrb[0].mxu0
  %v249 = vadd.f32 %v127, %v248
  %v250 = vpop.f32.mrb[0].mxu0
  %v251 = vadd.f32 %v131, %v250
  %v252 = vpop.f32.mrb[0].mxu0
  %v253 = vpop.f32.mrb[0].mxu0
  %254 = vdwg.mxu0
  %vm255 = vcmp.gt.f32.partialorder %v249, 0.0
  %vm256 = vcmp.gt.f32.partialorder %v251, 0.0
  %v257 = vmul.f32 %v249, 0.2
  %v258 = vmul.f32 %v251, 0.2
  %v259 = vsel %vm255, %v249, %v257
  %v260 = vsel %vm256, %v251, %v258
  %v261 = vpack.c.bf16 %v259, %v259
  %v262 = vpack.c.bf16 %v260, %v260
  %v263 = vld [vmem:[%s5] sm:$0xff]
  %v264 = vld [vmem:[%s5 + $0x8] sm:$0xff]
  %v265 = vld [vmem:[%s5 + $0x10] sm:$0xff]
  %v266 = vld [vmem:[%s5 + $0x18] sm:$0xff]
  %v267 = vld [vmem:[%s5 + $0x20] sm:$0xff]
  %v268 = vld [vmem:[%s5 + $0x28] sm:$0xff]
  %v269 = vld [vmem:[%s5 + $0x30] sm:$0xff]
  %v270 = vld [vmem:[%s5 + $0x38] sm:$0xff]
  %v271 = vld [vmem:[%s5 + $0x40] sm:$0xff]
  %v272 = vld [vmem:[%s5 + $0x48] sm:$0xff]
  %v273 = vld [vmem:[%s5 + $0x50] sm:$0xff]
  %v274 = vld [vmem:[%s5 + $0x58] sm:$0xff]
  %v275 = vld [vmem:[%s5 + $0x60] sm:$0xff]
  %v276 = vld [vmem:[%s5 + $0x68] sm:$0xff]
  %v277 = vld [vmem:[%s5 + $0x70] sm:$0xff]
  %v278 = vld [vmem:[%s5 + $0x78] sm:$0xff]
  %v279 = vld [vmem:[%s5 + $0x80] sm:$0xff]
  %v280 = vld [vmem:[%s5 + $0x88] sm:$0xff]
  %v281 = vld [vmem:[%s5 + $0x90] sm:$0xff]
  %v282 = vld [vmem:[%s5 + $0x98] sm:$0xff]
  %v283 = vld [vmem:[%s5 + $0xa0] sm:$0xff]
  %v284 = vld [vmem:[%s5 + $0xa8] sm:$0xff]
  %v285 = vld [vmem:[%s5 + $0xb0] sm:$0xff]
  %v286 = vld [vmem:[%s5 + $0xb8] sm:$0xff]
  %v287 = vld [vmem:[%s5 + $0xc0] sm:$0xff]
  %v288 = vld [vmem:[%s5 + $0xc8] sm:$0xff]
  %v289 = vld [vmem:[%s5 + $0xd0] sm:$0xff]
  %v290 = vld [vmem:[%s5 + $0xd8] sm:$0xff]
  %v291 = vld [vmem:[%s5 + $0xe0] sm:$0xff]
  %v292 = vld [vmem:[%s5 + $0xe8] sm:$0xff]
  %v293 = vld [vmem:[%s5 + $0xf0] sm:$0xff]
  %v294 = vld [vmem:[%s5 + $0xf8] sm:$0xff]
  %v295 = vld [vmem:[%s6] sm:$0x3]
  %v297 = vlaneseq
  %v298 = vshrl.u32 %v297, 7
  %v299 = vsub.s32 0, %v298
  %v300 = vrot.slane %v295, %v299
  %v301 = vlaneseq
  %v302 = vshrl.u32 %v301, 7
  %v303 = vsub.s32 1, %v302
  %v304 = vrot.slane %v295, %v303
  %v339 = vunpack.c.l.b16 %v263
  %v340 = vunpack.c.h.b16 %v263
  %v341 = vunpack.c.l.b16 %v264
  %v342 = vunpack.c.h.b16 %v264
  %v343 = vunpack.c.l.b16 %v265
  %v344 = vunpack.c.h.b16 %v265
  %v345 = vunpack.c.l.b16 %v266
  %v346 = vunpack.c.h.b16 %v266
  %v347 = vunpack.c.l.b16 %v267
  %v348 = vunpack.c.h.b16 %v267
  %v349 = vunpack.c.l.b16 %v268
  %v350 = vunpack.c.h.b16 %v268
  %v351 = vunpack.c.l.b16 %v269
  %v352 = vunpack.c.h.b16 %v269
  %v353 = vunpack.c.l.b16 %v270
  %v354 = vunpack.c.h.b16 %v270
  %v355 = vunpack.c.l.b16 %v271
  %v356 = vunpack.c.h.b16 %v271
  %v357 = vunpack.c.l.b16 %v272
  %v358 = vunpack.c.h.b16 %v272
  %v359 = vunpack.c.l.b16 %v273
  %v360 = vunpack.c.h.b16 %v273
  %v361 = vunpack.c.l.b16 %v274
  %v362 = vunpack.c.h.b16 %v274
  %v363 = vunpack.c.l.b16 %v275
  %v364 = vunpack.c.h.b16 %v275
  %v365 = vunpack.c.l.b16 %v276
  %v366 = vunpack.c.h.b16 %v276
  %v367 = vunpack.c.l.b16 %v277
  %v368 = vunpack.c.h.b16 %v277
  %v369 = vunpack.c.l.b16 %v278
  %v370 = vunpack.c.h.b16 %v278
  %v371 = vunpack.c.l.b16 %v279
  %v372 = vunpack.c.h.b16 %v279
  %v373 = vunpack.c.l.b16 %v280
  %v374 = vunpack.c.h.b16 %v280
  %v375 = vunpack.c.l.b16 %v281
  %v376 = vunpack.c.h.b16 %v281
  %v377 = vunpack.c.l.b16 %v282
  %v378 = vunpack.c.h.b16 %v282
  %v379 = vunpack.c.l.b16 %v283
  %v380 = vunpack.c.h.b16 %v283
  %v381 = vunpack.c.l.b16 %v284
  %v382 = vunpack.c.h.b16 %v284
  %v383 = vunpack.c.l.b16 %v285
  %v384 = vunpack.c.h.b16 %v285
  %v385 = vunpack.c.l.b16 %v286
  %v386 = vunpack.c.h.b16 %v286
  %v387 = vunpack.c.l.b16 %v287
  %v388 = vunpack.c.h.b16 %v287
  %v389 = vunpack.c.l.b16 %v288
  %v390 = vunpack.c.h.b16 %v288
  %v391 = vunpack.c.l.b16 %v289
  %v392 = vunpack.c.h.b16 %v289
  %v393 = vunpack.c.l.b16 %v290
  %v394 = vunpack.c.h.b16 %v290
  %v395 = vunpack.c.l.b16 %v291
  %v396 = vunpack.c.h.b16 %v291
  %v397 = vunpack.c.l.b16 %v292
  %v398 = vunpack.c.h.b16 %v292
  %v399 = vunpack.c.l.b16 %v293
  %v400 = vunpack.c.h.b16 %v293
  %v401 = vunpack.c.l.b16 %v294
  %v402 = vunpack.c.h.b16 %v294
  %v403 = vpack.c.b16 %v341, %v339
  %v404 = vpack.c.b16 %v342, %v340
  %v405 = vpack.c.b16 %v345, %v343
  %v406 = vpack.c.b16 %v346, %v344
  %v407 = vpack.c.b16 %v349, %v347
  %v408 = vpack.c.b16 %v350, %v348
  %v409 = vpack.c.b16 %v353, %v351
  %v410 = vpack.c.b16 %v354, %v352
  %v411 = vpack.c.b16 %v357, %v355
  %v412 = vpack.c.b16 %v358, %v356
  %v413 = vpack.c.b16 %v361, %v359
  %v414 = vpack.c.b16 %v362, %v360
  %v415 = vpack.c.b16 %v365, %v363
  %v416 = vpack.c.b16 %v366, %v364
  %v417 = vpack.c.b16 %v369, %v367
  %v418 = vpack.c.b16 %v370, %v368
  %v419 = vpack.c.b16 %v373, %v371
  %v420 = vpack.c.b16 %v374, %v372
  %v421 = vpack.c.b16 %v377, %v375
  %v422 = vpack.c.b16 %v378, %v376
  %v423 = vpack.c.b16 %v381, %v379
  %v424 = vpack.c.b16 %v382, %v380
  %v425 = vpack.c.b16 %v385, %v383
  %v426 = vpack.c.b16 %v386, %v384
  %v427 = vpack.c.b16 %v389, %v387
  %v428 = vpack.c.b16 %v390, %v388
  %v429 = vpack.c.b16 %v393, %v391
  %v430 = vpack.c.b16 %v394, %v392
  %v431 = vpack.c.b16 %v397, %v395
  %v432 = vpack.c.b16 %v398, %v396
  %v433 = vpack.c.b16 %v401, %v399
  %v434 = vpack.c.b16 %v402, %v400
  %467 = vmatprep.subr.bf16.mxu0 %v404
  %468 = vmatpush1.bf16.msra.mxu0 %v403
  %469 = vmatprep.subr.bf16.mxu0 %v406
  %470 = vmatpush1.bf16.msra.mxu0 %v405
  %471 = vmatprep.subr.bf16.mxu0 %v408
  %472 = vmatpush1.bf16.msra.mxu0 %v407
  %473 = vmatprep.subr.bf16.mxu0 %v410
  %474 = vmatpush1.bf16.msra.mxu0 %v409
  %475 = vmatprep.subr.bf16.mxu0 %v412
  %476 = vmatpush1.bf16.msra.mxu0 %v411
  %477 = vmatprep.subr.bf16.mxu0 %v414
  %478 = vmatpush1.bf16.msra.mxu0 %v413
  %479 = vmatprep.subr.bf16.mxu0 %v416
  %480 = vmatpush1.bf16.msra.mxu0 %v415
  %481 = vmatprep.subr.bf16.mxu0 %v418
  %482 = vmatpush1.bf16.msra.mxu0 %v417
  %483 = vmatprep.subr.bf16.mxu0 %v420
  %484 = vmatpush1.bf16.msra.mxu0 %v419
  %485 = vmatprep.subr.bf16.mxu0 %v422
  %486 = vmatpush1.bf16.msra.mxu0 %v421
  %487 = vmatprep.subr.bf16.mxu0 %v424
  %488 = vmatpush1.bf16.msra.mxu0 %v423
  %489 = vmatprep.subr.bf16.mxu0 %v426
  %490 = vmatpush1.bf16.msra.mxu0 %v425
  %491 = vmatprep.subr.bf16.mxu0 %v428
  %492 = vmatpush1.bf16.msra.mxu0 %v427
  %493 = vmatprep.subr.bf16.mxu0 %v430
  %494 = vmatpush1.bf16.msra.mxu0 %v429
  %495 = vmatprep.subr.bf16.mxu0 %v432
  %496 = vmatpush1.bf16.msra.mxu0 %v431
  %497 = vmatprep.subr.bf16.mxu0 %v434
  %498 = vmatpush1.bf16.msra.mxu0 %v433
  %499 = vmatprep.mubr.bf16.mxu0 %v262
  %500 = vmatmul.mubr.bf16.gmra.mrb[0].mxu0 %v261
  %v501 = vpop.f32.mrb[0].mxu0
  %v502 = vadd.f32 %v300, %v501
  %v503 = vpop.f32.mrb[0].mxu0
  %v504 = vadd.f32 %v304, %v503
  %v505 = vpop.f32.mrb[0].mxu0
  %v506 = vpop.f32.mrb[0].mxu0
  %507 = vdwg.mxu0
  %vm508 = vcmp.gt.f32.partialorder %v502, 0.0
  %vm509 = vcmp.gt.f32.partialorder %v504, 0.0
  %v510 = vmul.f32 %v502, 0.2
  %v511 = vmul.f32 %v504, 0.2
  %v512 = vsel %vm508, %v502, %v510
  %v513 = vsel %vm509, %v504, %v511
  %v514 = vpack.c.bf16 %v512, %v512
  %v515 = vpack.c.bf16 %v513, %v513
  %v516 = vld [vmem:[%s7] sm:$0xff]
  %v517 = vld [vmem:[%s7 + $0x8] sm:$0xff]
  %v518 = vld [vmem:[%s7 + $0x10] sm:$0xff]
  %v519 = vld [vmem:[%s7 + $0x18] sm:$0xf]
  %v520 = vld [vmem:[%s7 + $0x1c] sm:$0xff]
  %v521 = vld [vmem:[%s7 + $0x24] sm:$0xff]
  %v522 = vld [vmem:[%s7 + $0x2c] sm:$0xff]
  %v523 = vld [vmem:[%s7 + $0x34] sm:$0xf]
  %v524 = vld [vmem:[%s7 + $0x38] sm:$0xff]
  %v525 = vld [vmem:[%s7 + $0x40] sm:$0xff]
  %v526 = vld [vmem:[%s7 + $0x48] sm:$0xff]
  %v527 = vld [vmem:[%s7 + $0x50] sm:$0xf]
  %v528 = vld [vmem:[%s7 + $0x54] sm:$0xff]
  %v529 = vld [vmem:[%s7 + $0x5c] sm:$0xff]
  %v530 = vld [vmem:[%s7 + $0x64] sm:$0xff]
  %v531 = vld [vmem:[%s7 + $0x6c] sm:$0xf]
  %v532 = vld [vmem:[%s7 + $0x70] sm:$0xff]
  %v533 = vld [vmem:[%s7 + $0x78] sm:$0xff]
  %v534 = vld [vmem:[%s7 + $0x80] sm:$0xff]
  %v535 = vld [vmem:[%s7 + $0x88] sm:$0xf]
  %v536 = vld [vmem:[%s7 + $0x8c] sm:$0xff]
  %v537 = vld [vmem:[%s7 + $0x94] sm:$0xff]
  %v538 = vld [vmem:[%s7 + $0x9c] sm:$0xff]
  %v539 = vld [vmem:[%s7 + $0xa4] sm:$0xf]
  %v540 = vld [vmem:[%s7 + $0xa8] sm:$0xff]
  %v541 = vld [vmem:[%s7 + $0xb0] sm:$0xff]
  %v542 = vld [vmem:[%s7 + $0xb8] sm:$0xff]
  %v543 = vld [vmem:[%s7 + $0xc0] sm:$0xf]
  %v544 = vld [vmem:[%s7 + $0xc4] sm:$0xff]
  %v545 = vld [vmem:[%s7 + $0xcc] sm:$0xff]
  %v546 = vld [vmem:[%s7 + $0xd4] sm:$0xff]
  %v547 = vld [vmem:[%s7 + $0xdc] sm:$0xf]
  %v548 = vld [vmem:[%s7 + $0xe0] sm:$0xff]
  %v549 = vld [vmem:[%s7 + $0xe8] sm:$0xff]
  %v550 = vld [vmem:[%s7 + $0xf0] sm:$0xff]
  %v551 = vld [vmem:[%s7 + $0xf8] sm:$0xf]
  %v552 = vld [vmem:[%s7 + $0xfc] sm:$0xff]
  %v553 = vld [vmem:[%s7 + $0x104] sm:$0xff]
  %v554 = vld [vmem:[%s7 + $0x10c] sm:$0xff]
  %v555 = vld [vmem:[%s7 + $0x114] sm:$0xf]
  %v556 = vld [vmem:[%s7 + $0x118] sm:$0xff]
  %v557 = vld [vmem:[%s7 + $0x120] sm:$0xff]
  %v558 = vld [vmem:[%s7 + $0x128] sm:$0xff]
  %v559 = vld [vmem:[%s7 + $0x130] sm:$0xf]
  %v560 = vld [vmem:[%s7 + $0x134] sm:$0xff]
  %v561 = vld [vmem:[%s7 + $0x13c] sm:$0xff]
  %v562 = vld [vmem:[%s7 + $0x144] sm:$0xff]
  %v563 = vld [vmem:[%s7 + $0x14c] sm:$0xf]
  %v564 = vld [vmem:[%s7 + $0x150] sm:$0xff]
  %v565 = vld [vmem:[%s7 + $0x158] sm:$0xff]
  %v566 = vld [vmem:[%s7 + $0x160] sm:$0xff]
  %v567 = vld [vmem:[%s7 + $0x168] sm:$0xf]
  %v568 = vld [vmem:[%s7 + $0x16c] sm:$0xff]
  %v569 = vld [vmem:[%s7 + $0x174] sm:$0xff]
  %v570 = vld [vmem:[%s7 + $0x17c] sm:$0xff]
  %v571 = vld [vmem:[%s7 + $0x184] sm:$0xf]
  %v572 = vld [vmem:[%s7 + $0x188] sm:$0xff]
  %v573 = vld [vmem:[%s7 + $0x190] sm:$0xff]
  %v574 = vld [vmem:[%s7 + $0x198] sm:$0xff]
  %v575 = vld [vmem:[%s7 + $0x1a0] sm:$0xf]
  %v576 = vld [vmem:[%s7 + $0x1a4] sm:$0xff]
  %v577 = vld [vmem:[%s7 + $0x1ac] sm:$0xff]
  %v578 = vld [vmem:[%s7 + $0x1b4] sm:$0xff]
  %v579 = vld [vmem:[%s7 + $0x1bc] sm:$0xf]
  %v580 = vld [vmem:[%s7 + $0x1c0] sm:$0xff]
  %v581 = vld [vmem:[%s7 + $0x1c8] sm:$0xff]
  %v582 = vld [vmem:[%s7 + $0x1d0] sm:$0xff]
  %v583 = vld [vmem:[%s7 + $0x1d8] sm:$0xf]
  %v584 = vld [vmem:[%s7 + $0x1dc] sm:$0xff]
  %v585 = vld [vmem:[%s7 + $0x1e4] sm:$0xff]
  %v586 = vld [vmem:[%s7 + $0x1ec] sm:$0xff]
  %v587 = vld [vmem:[%s7 + $0x1f4] sm:$0xf]
  %v588 = vld [vmem:[%s7 + $0x1f8] sm:$0xff]
  %v589 = vld [vmem:[%s7 + $0x200] sm:$0xff]
  %v590 = vld [vmem:[%s7 + $0x208] sm:$0xff]
  %v591 = vld [vmem:[%s7 + $0x210] sm:$0xf]
  %v592 = vld [vmem:[%s7 + $0x214] sm:$0xff]
  %v593 = vld [vmem:[%s7 + $0x21c] sm:$0xff]
  %v594 = vld [vmem:[%s7 + $0x224] sm:$0xff]
  %v595 = vld [vmem:[%s7 + $0x22c] sm:$0xf]
  %v596 = vld [vmem:[%s7 + $0x230] sm:$0xff]
  %v597 = vld [vmem:[%s7 + $0x238] sm:$0xff]
  %v598 = vld [vmem:[%s7 + $0x240] sm:$0xff]
  %v599 = vld [vmem:[%s7 + $0x248] sm:$0xf]
  %v600 = vld [vmem:[%s7 + $0x24c] sm:$0xff]
  %v601 = vld [vmem:[%s7 + $0x254] sm:$0xff]
  %v602 = vld [vmem:[%s7 + $0x25c] sm:$0xff]
  %v603 = vld [vmem:[%s7 + $0x264] sm:$0xf]
  %v604 = vld [vmem:[%s7 + $0x268] sm:$0xff]
  %v605 = vld [vmem:[%s7 + $0x270] sm:$0xff]
  %v606 = vld [vmem:[%s7 + $0x278] sm:$0xff]
  %v607 = vld [vmem:[%s7 + $0x280] sm:$0xf]
  %v608 = vld [vmem:[%s7 + $0x284] sm:$0xff]
  %v609 = vld [vmem:[%s7 + $0x28c] sm:$0xff]
  %v610 = vld [vmem:[%s7 + $0x294] sm:$0xff]
  %v611 = vld [vmem:[%s7 + $0x29c] sm:$0xf]
  %v612 = vld [vmem:[%s7 + $0x2a0] sm:$0xff]
  %v613 = vld [vmem:[%s7 + $0x2a8] sm:$0xff]
  %v614 = vld [vmem:[%s7 + $0x2b0] sm:$0xff]
  %v615 = vld [vmem:[%s7 + $0x2b8] sm:$0xf]
  %v616 = vld [vmem:[%s7 + $0x2bc] sm:$0xff]
  %v617 = vld [vmem:[%s7 + $0x2c4] sm:$0xff]
  %v618 = vld [vmem:[%s7 + $0x2cc] sm:$0xff]
  %v619 = vld [vmem:[%s7 + $0x2d4] sm:$0xf]
  %v620 = vld [vmem:[%s7 + $0x2d8] sm:$0xff]
  %v621 = vld [vmem:[%s7 + $0x2e0] sm:$0xff]
  %v622 = vld [vmem:[%s7 + $0x2e8] sm:$0xff]
  %v623 = vld [vmem:[%s7 + $0x2f0] sm:$0xf]
  %v624 = vld [vmem:[%s7 + $0x2f4] sm:$0xff]
  %v625 = vld [vmem:[%s7 + $0x2fc] sm:$0xff]
  %v626 = vld [vmem:[%s7 + $0x304] sm:$0xff]
  %v627 = vld [vmem:[%s7 + $0x30c] sm:$0xf]
  %v628 = vld [vmem:[%s7 + $0x310] sm:$0xff]
  %v629 = vld [vmem:[%s7 + $0x318] sm:$0xff]
  %v630 = vld [vmem:[%s7 + $0x320] sm:$0xff]
  %v631 = vld [vmem:[%s7 + $0x328] sm:$0xf]
  %v632 = vld [vmem:[%s7 + $0x32c] sm:$0xff]
  %v633 = vld [vmem:[%s7 + $0x334] sm:$0xff]
  %v634 = vld [vmem:[%s7 + $0x33c] sm:$0xff]
  %v635 = vld [vmem:[%s7 + $0x344] sm:$0xf]
  %v636 = vld [vmem:[%s7 + $0x348] sm:$0xff]
  %v637 = vld [vmem:[%s7 + $0x350] sm:$0xff]
  %v638 = vld [vmem:[%s7 + $0x358] sm:$0xff]
  %v639 = vld [vmem:[%s7 + $0x360] sm:$0xf]
  %v640 = vld [vmem:[%s7 + $0x364] sm:$0xff]
  %v641 = vld [vmem:[%s7 + $0x36c] sm:$0xff]
  %v642 = vld [vmem:[%s7 + $0x374] sm:$0xff]
  %v643 = vld [vmem:[%s7 + $0x37c] sm:$0xf]
  %v644 = vld [vmem:[%s8] sm:$0x7f]
  %v646 = vlaneseq
  %v647 = vshrl.u32 %v646, 7
  %v648 = vsub.s32 0, %v647
  %v649 = vrot.slane %v644, %v648
  %v650 = vlaneseq
  %v651 = vshrl.u32 %v650, 7
  %v652 = vsub.s32 1, %v651
  %v653 = vrot.slane %v644, %v652
  %v654 = vlaneseq
  %v655 = vshrl.u32 %v654, 7
  %v656 = vsub.s32 2, %v655
  %v657 = vrot.slane %v644, %v656
  %v658 = vlaneseq
  %v659 = vshrl.u32 %v658, 7
  %v660 = vsub.s32 3, %v659
  %v661 = vrot.slane %v644, %v660
  %v662 = vlaneseq
  %v663 = vshrl.u32 %v662, 7
  %v664 = vsub.s32 4, %v663
  %v665 = vrot.slane %v644, %v664
  %v666 = vlaneseq
  %v667 = vshrl.u32 %v666, 7
  %v668 = vsub.s32 5, %v667
  %v669 = vrot.slane %v644, %v668
  %v670 = vlaneseq
  %v671 = vshrl.u32 %v670, 7
  %v672 = vsub.s32 6, %v671
  %v673 = vrot.slane %v644, %v672
  %v809 = vunpack.c.l.b16 %v516
  %v810 = vunpack.c.h.b16 %v516
  %v811 = vunpack.c.l.b16 %v517
  %v812 = vunpack.c.h.b16 %v517
  %v813 = vunpack.c.l.b16 %v518
  %v814 = vunpack.c.h.b16 %v518
  %v815 = vunpack.c.l.b16 %v519
  %v816 = vunpack.c.l.b16 %v520
  %v817 = vunpack.c.h.b16 %v520
  %v818 = vunpack.c.l.b16 %v521
  %v819 = vunpack.c.h.b16 %v521
  %v820 = vunpack.c.l.b16 %v522
  %v821 = vunpack.c.h.b16 %v522
  %v822 = vunpack.c.l.b16 %v523
  %v823 = vunpack.c.l.b16 %v524
  %v824 = vunpack.c.h.b16 %v524
  %v825 = vunpack.c.l.b16 %v525
  %v826 = vunpack.c.h.b16 %v525
  %v827 = vunpack.c.l.b16 %v526
  %v828 = vunpack.c.h.b16 %v526
  %v829 = vunpack.c.l.b16 %v527
  %v830 = vunpack.c.l.b16 %v528
  %v831 = vunpack.c.h.b16 %v528
  %v832 = vunpack.c.l.b16 %v529
  %v833 = vunpack.c.h.b16 %v529
  %v834 = vunpack.c.l.b16 %v530
  %v835 = vunpack.c.h.b16 %v530
  %v836 = vunpack.c.l.b16 %v531
  %v837 = vunpack.c.l.b16 %v532
  %v838 = vunpack.c.h.b16 %v532
  %v839 = vunpack.c.l.b16 %v533
  %v840 = vunpack.c.h.b16 %v533
  %v841 = vunpack.c.l.b16 %v534
  %v842 = vunpack.c.h.b16 %v534
  %v843 = vunpack.c.l.b16 %v535
  %v844 = vunpack.c.l.b16 %v536
  %v845 = vunpack.c.h.b16 %v536
  %v846 = vunpack.c.l.b16 %v537
  %v847 = vunpack.c.h.b16 %v537
  %v848 = vunpack.c.l.b16 %v538
  %v849 = vunpack.c.h.b16 %v538
  %v850 = vunpack.c.l.b16 %v539
  %v851 = vunpack.c.l.b16 %v540
  %v852 = vunpack.c.h.b16 %v540
  %v853 = vunpack.c.l.b16 %v541
  %v854 = vunpack.c.h.b16 %v541
  %v855 = vunpack.c.l.b16 %v542
  %v856 = vunpack.c.h.b16 %v542
  %v857 = vunpack.c.l.b16 %v543
  %v858 = vunpack.c.l.b16 %v544
  %v859 = vunpack.c.h.b16 %v544
  %v860 = vunpack.c.l.b16 %v545
  %v861 = vunpack.c.h.b16 %v545
  %v862 = vunpack.c.l.b16 %v546
  %v863 = vunpack.c.h.b16 %v546
  %v864 = vunpack.c.l.b16 %v547
  %v865 = vunpack.c.l.b16 %v548
  %v866 = vunpack.c.h.b16 %v548
  %v867 = vunpack.c.l.b16 %v549
  %v868 = vunpack.c.h.b16 %v549
  %v869 = vunpack.c.l.b16 %v550
  %v870 = vunpack.c.h.b16 %v550
  %v871 = vunpack.c.l.b16 %v551
  %v872 = vunpack.c.l.b16 %v552
  %v873 = vunpack.c.h.b16 %v552
  %v874 = vunpack.c.l.b16 %v553
  %v875 = vunpack.c.h.b16 %v553
  %v876 = vunpack.c.l.b16 %v554
  %v877 = vunpack.c.h.b16 %v554
  %v878 = vunpack.c.l.b16 %v555
  %v879 = vunpack.c.l.b16 %v556
  %v880 = vunpack.c.h.b16 %v556
  %v881 = vunpack.c.l.b16 %v557
  %v882 = vunpack.c.h.b16 %v557
  %v883 = vunpack.c.l.b16 %v558
  %v884 = vunpack.c.h.b16 %v558
  %v885 = vunpack.c.l.b16 %v559
  %v886 = vunpack.c.l.b16 %v560
  %v887 = vunpack.c.h.b16 %v560
  %v888 = vunpack.c.l.b16 %v561
  %v889 = vunpack.c.h.b16 %v561
  %v890 = vunpack.c.l.b16 %v562
  %v891 = vunpack.c.h.b16 %v562
  %v892 = vunpack.c.l.b16 %v563
  %v893 = vunpack.c.l.b16 %v564
  %v894 = vunpack.c.h.b16 %v564
  %v895 = vunpack.c.l.b16 %v565
  %v896 = vunpack.c.h.b16 %v565
  %v897 = vunpack.c.l.b16 %v566
  %v898 = vunpack.c.h.b16 %v566
  %v899 = vunpack.c.l.b16 %v567
  %v900 = vunpack.c.l.b16 %v568
  %v901 = vunpack.c.h.b16 %v568
  %v902 = vunpack.c.l.b16 %v569
  %v903 = vunpack.c.h.b16 %v569
  %v904 = vunpack.c.l.b16 %v570
  %v905 = vunpack.c.h.b16 %v570
  %v906 = vunpack.c.l.b16 %v571
  %v907 = vunpack.c.l.b16 %v572
  %v908 = vunpack.c.h.b16 %v572
  %v909 = vunpack.c.l.b16 %v573
  %v910 = vunpack.c.h.b16 %v573
  %v911 = vunpack.c.l.b16 %v574
  %v912 = vunpack.c.h.b16 %v574
  %v913 = vunpack.c.l.b16 %v575
  %v914 = vunpack.c.l.b16 %v576
  %v915 = vunpack.c.h.b16 %v576
  %v916 = vunpack.c.l.b16 %v577
  %v917 = vunpack.c.h.b16 %v577
  %v918 = vunpack.c.l.b16 %v578
  %v919 = vunpack.c.h.b16 %v578
  %v920 = vunpack.c.l.b16 %v579
  %v921 = vunpack.c.l.b16 %v580
  %v922 = vunpack.c.h.b16 %v580
  %v923 = vunpack.c.l.b16 %v581
  %v924 = vunpack.c.h.b16 %v581
  %v925 = vunpack.c.l.b16 %v582
  %v926 = vunpack.c.h.b16 %v582
  %v927 = vunpack.c.l.b16 %v583
  %v928 = vunpack.c.l.b16 %v584
  %v929 = vunpack.c.h.b16 %v584
  %v930 = vunpack.c.l.b16 %v585
  %v931 = vunpack.c.h.b16 %v585
  %v932 = vunpack.c.l.b16 %v586
  %v933 = vunpack.c.h.b16 %v586
  %v934 = vunpack.c.l.b16 %v587
  %v935 = vunpack.c.l.b16 %v588
  %v936 = vunpack.c.h.b16 %v588
  %v937 = vunpack.c.l.b16 %v589
  %v938 = vunpack.c.h.b16 %v589
  %v939 = vunpack.c.l.b16 %v590
  %v940 = vunpack.c.h.b16 %v590
  %v941 = vunpack.c.l.b16 %v591
  %v942 = vunpack.c.l.b16 %v592
  %v943 = vunpack.c.h.b16 %v592
  %v944 = vunpack.c.l.b16 %v593
  %v945 = vunpack.c.h.b16 %v593
  %v946 = vunpack.c.l.b16 %v594
  %v947 = vunpack.c.h.b16 %v594
  %v948 = vunpack.c.l.b16 %v595
  %v949 = vunpack.c.l.b16 %v596
  %v950 = vunpack.c.h.b16 %v596
  %v951 = vunpack.c.l.b16 %v597
  %v952 = vunpack.c.h.b16 %v597
  %v953 = vunpack.c.l.b16 %v598
  %v954 = vunpack.c.h.b16 %v598
  %v955 = vunpack.c.l.b16 %v599
  %v956 = vunpack.c.l.b16 %v600
  %v957 = vunpack.c.h.b16 %v600
  %v958 = vunpack.c.l.b16 %v601
  %v959 = vunpack.c.h.b16 %v601
  %v960 = vunpack.c.l.b16 %v602
  %v961 = vunpack.c.h.b16 %v602
  %v962 = vunpack.c.l.b16 %v603
  %v963 = vunpack.c.l.b16 %v604
  %v964 = vunpack.c.h.b16 %v604
  %v965 = vunpack.c.l.b16 %v605
  %v966 = vunpack.c.h.b16 %v605
  %v967 = vunpack.c.l.b16 %v606
  %v968 = vunpack.c.h.b16 %v606
  %v969 = vunpack.c.l.b16 %v607
  %v970 = vunpack.c.l.b16 %v608
  %v971 = vunpack.c.h.b16 %v608
  %v972 = vunpack.c.l.b16 %v609
  %v973 = vunpack.c.h.b16 %v609
  %v974 = vunpack.c.l.b16 %v610
  %v975 = vunpack.c.h.b16 %v610
  %v976 = vunpack.c.l.b16 %v611
  %v977 = vunpack.c.l.b16 %v612
  %v978 = vunpack.c.h.b16 %v612
  %v979 = vunpack.c.l.b16 %v613
  %v980 = vunpack.c.h.b16 %v613
  %v981 = vunpack.c.l.b16 %v614
  %v982 = vunpack.c.h.b16 %v614
  %v983 = vunpack.c.l.b16 %v615
  %v984 = vunpack.c.l.b16 %v616
  %v985 = vunpack.c.h.b16 %v616
  %v986 = vunpack.c.l.b16 %v617
  %v987 = vunpack.c.h.b16 %v617
  %v988 = vunpack.c.l.b16 %v618
  %v989 = vunpack.c.h.b16 %v618
  %v990 = vunpack.c.l.b16 %v619
  %v991 = vunpack.c.l.b16 %v620
  %v992 = vunpack.c.h.b16 %v620
  %v993 = vunpack.c.l.b16 %v621
  %v994 = vunpack.c.h.b16 %v621
  %v995 = vunpack.c.l.b16 %v622
  %v996 = vunpack.c.h.b16 %v622
  %v997 = vunpack.c.l.b16 %v623
  %v998 = vunpack.c.l.b16 %v624
  %v999 = vunpack.c.h.b16 %v624
  %v1000 = vunpack.c.l.b16 %v625
  %v1001 = vunpack.c.h.b16 %v625
  %v1002 = vunpack.c.l.b16 %v626
  %v1003 = vunpack.c.h.b16 %v626
  %v1004 = vunpack.c.l.b16 %v627
  %v1005 = vunpack.c.l.b16 %v628
  %v1006 = vunpack.c.h.b16 %v628
  %v1007 = vunpack.c.l.b16 %v629
  %v1008 = vunpack.c.h.b16 %v629
  %v1009 = vunpack.c.l.b16 %v630
  %v1010 = vunpack.c.h.b16 %v630
  %v1011 = vunpack.c.l.b16 %v631
  %v1012 = vunpack.c.l.b16 %v632
  %v1013 = vunpack.c.h.b16 %v632
  %v1014 = vunpack.c.l.b16 %v633
  %v1015 = vunpack.c.h.b16 %v633
  %v1016 = vunpack.c.l.b16 %v634
  %v1017 = vunpack.c.h.b16 %v634
  %v1018 = vunpack.c.l.b16 %v635
  %v1019 = vunpack.c.l.b16 %v636
  %v1020 = vunpack.c.h.b16 %v636
  %v1021 = vunpack.c.l.b16 %v637
  %v1022 = vunpack.c.h.b16 %v637
  %v1023 = vunpack.c.l.b16 %v638
  %v1024 = vunpack.c.h.b16 %v638
  %v1025 = vunpack.c.l.b16 %v639
  %v1026 = vunpack.c.l.b16 %v640
  %v1027 = vunpack.c.h.b16 %v640
  %v1028 = vunpack.c.l.b16 %v641
  %v1029 = vunpack.c.h.b16 %v641
  %v1030 = vunpack.c.l.b16 %v642
  %v1031 = vunpack.c.h.b16 %v642
  %v1032 = vunpack.c.l.b16 %v643
  %v1033 = vpack.c.b16 %v816, %v809
  %v1034 = vpack.c.b16 %v817, %v810
  %v1035 = vpack.c.b16 %v818, %v811
  %v1036 = vpack.c.b16 %v819, %v812
  %v1037 = vpack.c.b16 %v820, %v813
  %v1038 = vpack.c.b16 %v821, %v814
  %v1039 = vpack.c.b16 %v822, %v815
  %v1040 = vpack.c.b16 %v830, %v823
  %v1041 = vpack.c.b16 %v831, %v824
  %v1042 = vpack.c.b16 %v832, %v825
  %v1043 = vpack.c.b16 %v833, %v826
  %v1044 = vpack.c.b16 %v834, %v827
  %v1045 = vpack.c.b16 %v835, %v828
  %v1046 = vpack.c.b16 %v836, %v829
  %v1047 = vpack.c.b16 %v844, %v837
  %v1048 = vpack.c.b16 %v845, %v838
  %v1049 = vpack.c.b16 %v846, %v839
  %v1050 = vpack.c.b16 %v847, %v840
  %v1051 = vpack.c.b16 %v848, %v841
  %v1052 = vpack.c.b16 %v849, %v842
  %v1053 = vpack.c.b16 %v850, %v843
  %v1054 = vpack.c.b16 %v858, %v851
  %v1055 = vpack.c.b16 %v859, %v852
  %v1056 = vpack.c.b16 %v860, %v853
  %v1057 = vpack.c.b16 %v861, %v854
  %v1058 = vpack.c.b16 %v862, %v855
  %v1059 = vpack.c.b16 %v863, %v856
  %v1060 = vpack.c.b16 %v864, %v857
  %v1061 = vpack.c.b16 %v872, %v865
  %v1062 = vpack.c.b16 %v873, %v866
  %v1063 = vpack.c.b16 %v874, %v867
  %v1064 = vpack.c.b16 %v875, %v868
  %v1065 = vpack.c.b16 %v876, %v869
  %v1066 = vpack.c.b16 %v877, %v870
  %v1067 = vpack.c.b16 %v878, %v871
  %v1068 = vpack.c.b16 %v886, %v879
  %v1069 = vpack.c.b16 %v887, %v880
  %v1070 = vpack.c.b16 %v888, %v881
  %v1071 = vpack.c.b16 %v889, %v882
  %v1072 = vpack.c.b16 %v890, %v883
  %v1073 = vpack.c.b16 %v891, %v884
  %v1074 = vpack.c.b16 %v892, %v885
  %v1075 = vpack.c.b16 %v900, %v893
  %v1076 = vpack.c.b16 %v901, %v894
  %v1077 = vpack.c.b16 %v902, %v895
  %v1078 = vpack.c.b16 %v903, %v896
  %v1079 = vpack.c.b16 %v904, %v897
  %v1080 = vpack.c.b16 %v905, %v898
  %v1081 = vpack.c.b16 %v906, %v899
  %v1082 = vpack.c.b16 %v914, %v907
  %v1083 = vpack.c.b16 %v915, %v908
  %v1084 = vpack.c.b16 %v916, %v909
  %v1085 = vpack.c.b16 %v917, %v910
  %v1086 = vpack.c.b16 %v918, %v911
  %v1087 = vpack.c.b16 %v919, %v912
  %v1088 = vpack.c.b16 %v920, %v913
  %v1089 = vpack.c.b16 %v928, %v921
  %v1090 = vpack.c.b16 %v929, %v922
  %v1091 = vpack.c.b16 %v930, %v923
  %v1092 = vpack.c.b16 %v931, %v924
  %v1093 = vpack.c.b16 %v932, %v925
  %v1094 = vpack.c.b16 %v933, %v926
  %v1095 = vpack.c.b16 %v934, %v927
  %v1096 = vpack.c.b16 %v942, %v935
  %v1097 = vpack.c.b16 %v943, %v936
  %v1098 = vpack.c.b16 %v944, %v937
  %v1099 = vpack.c.b16 %v945, %v938
  %v1100 = vpack.c.b16 %v946, %v939
  %v1101 = vpack.c.b16 %v947, %v940
  %v1102 = vpack.c.b16 %v948, %v941
  %v1103 = vpack.c.b16 %v956, %v949
  %v1104 = vpack.c.b16 %v957, %v950
  %v1105 = vpack.c.b16 %v958, %v951
  %v1106 = vpack.c.b16 %v959, %v952
  %v1107 = vpack.c.b16 %v960, %v953
  %v1108 = vpack.c.b16 %v961, %v954
  %v1109 = vpack.c.b16 %v962, %v955
  %v1110 = vpack.c.b16 %v970, %v963
  %v1111 = vpack.c.b16 %v971, %v964
  %v1112 = vpack.c.b16 %v972, %v965
  %v1113 = vpack.c.b16 %v973, %v966
  %v1114 = vpack.c.b16 %v974, %v967
  %v1115 = vpack.c.b16 %v975, %v968
  %v1116 = vpack.c.b16 %v976, %v969
  %v1117 = vpack.c.b16 %v984, %v977
  %v1118 = vpack.c.b16 %v985, %v978
  %v1119 = vpack.c.b16 %v986, %v979
  %v1120 = vpack.c.b16 %v987, %v980
  %v1121 = vpack.c.b16 %v988, %v981
  %v1122 = vpack.c.b16 %v989, %v982
  %v1123 = vpack.c.b16 %v990, %v983
  %v1124 = vpack.c.b16 %v998, %v991
  %v1125 = vpack.c.b16 %v999, %v992
  %v1126 = vpack.c.b16 %v1000, %v993
  %v1127 = vpack.c.b16 %v1001, %v994
  %v1128 = vpack.c.b16 %v1002, %v995
  %v1129 = vpack.c.b16 %v1003, %v996
  %v1130 = vpack.c.b16 %v1004, %v997
  %v1131 = vpack.c.b16 %v1012, %v1005
  %v1132 = vpack.c.b16 %v1013, %v1006
  %v1133 = vpack.c.b16 %v1014, %v1007
  %v1134 = vpack.c.b16 %v1015, %v1008
  %v1135 = vpack.c.b16 %v1016, %v1009
  %v1136 = vpack.c.b16 %v1017, %v1010
  %v1137 = vpack.c.b16 %v1018, %v1011
  %v1138 = vpack.c.b16 %v1026, %v1019
  %v1139 = vpack.c.b16 %v1027, %v1020
  %v1140 = vpack.c.b16 %v1028, %v1021
  %v1141 = vpack.c.b16 %v1029, %v1022
  %v1142 = vpack.c.b16 %v1030, %v1023
  %v1143 = vpack.c.b16 %v1031, %v1024
  %v1144 = vpack.c.b16 %v1032, %v1025
  %1257 = vmatprep.subr.bf16.mxu0 %v1034
  %1258 = vmatpush1.bf16.msra.mxu0 %v1033
  %1259 = vmatprep.subr.bf16.mxu0 %v1041
  %1260 = vmatpush1.bf16.msra.mxu0 %v1040
  %1261 = vmatprep.subr.bf16.mxu0 %v1048
  %1262 = vmatpush1.bf16.msra.mxu0 %v1047
  %1263 = vmatprep.subr.bf16.mxu0 %v1055
  %1264 = vmatpush1.bf16.msra.mxu0 %v1054
  %1265 = vmatprep.subr.bf16.mxu0 %v1062
  %1266 = vmatpush1.bf16.msra.mxu0 %v1061
  %1267 = vmatprep.subr.bf16.mxu0 %v1069
  %1268 = vmatpush1.bf16.msra.mxu0 %v1068
  %1269 = vmatprep.subr.bf16.mxu0 %v1076
  %1270 = vmatpush1.bf16.msra.mxu0 %v1075
  %1271 = vmatprep.subr.bf16.mxu0 %v1083
  %1272 = vmatpush1.bf16.msra.mxu0 %v1082
  %1273 = vmatprep.subr.bf16.mxu0 %v1090
  %1274 = vmatpush1.bf16.msra.mxu0 %v1089
  %1275 = vmatprep.subr.bf16.mxu0 %v1097
  %1276 = vmatpush1.bf16.msra.mxu0 %v1096
  %1277 = vmatprep.subr.bf16.mxu0 %v1104
  %1278 = vmatpush1.bf16.msra.mxu0 %v1103
  %1279 = vmatprep.subr.bf16.mxu0 %v1111
  %1280 = vmatpush1.bf16.msra.mxu0 %v1110
  %1281 = vmatprep.subr.bf16.mxu0 %v1118
  %1282 = vmatpush1.bf16.msra.mxu0 %v1117
  %1283 = vmatprep.subr.bf16.mxu0 %v1125
  %1284 = vmatpush1.bf16.msra.mxu0 %v1124
  %1285 = vmatprep.subr.bf16.mxu0 %v1132
  %1286 = vmatpush1.bf16.msra.mxu0 %v1131
  %1287 = vmatprep.subr.bf16.mxu0 %v1139
  %1288 = vmatpush1.bf16.msra.mxu0 %v1138
  %1289 = vmatprep.mubr.bf16.mxu0 %v515
  %1290 = vmatmul.mubr.bf16.gmra.mrb[0].mxu0 %v514
  %v1291 = vpop.f32.mrb[0].mxu0
  %v1292 = vadd.f32 %v649, %v1291
  %v1293 = vpop.f32.mrb[0].mxu0
  %v1294 = vadd.f32 %v653, %v1293
  %v1295 = vpop.f32.mrb[0].mxu0
  %v1296 = vpop.f32.mrb[0].mxu0
  %1297 = vdwg.mxu0
  %1298 = vmatprep.subr.bf16.mxu0 %v1036
  %1299 = vmatpush1.bf16.msra.mxu0 %v1035
  %1300 = vmatprep.subr.bf16.mxu0 %v1043
  %1301 = vmatpush1.bf16.msra.mxu0 %v1042
  %1302 = vmatprep.subr.bf16.mxu0 %v1050
  %1303 = vmatpush1.bf16.msra.mxu0 %v1049
  %1304 = vmatprep.subr.bf16.mxu0 %v1057
  %1305 = vmatpush1.bf16.msra.mxu0 %v1056
  %1306 = vmatprep.subr.bf16.mxu0 %v1064
  %1307 = vmatpush1.bf16.msra.mxu0 %v1063
  %1308 = vmatprep.subr.bf16.mxu0 %v1071
  %1309 = vmatpush1.bf16.msra.mxu0 %v1070
  %1310 = vmatprep.subr.bf16.mxu0 %v1078
  %1311 = vmatpush1.bf16.msra.mxu0 %v1077
  %1312 = vmatprep.subr.bf16.mxu0 %v1085
  %1313 = vmatpush1.bf16.msra.mxu0 %v1084
  %1314 = vmatprep.subr.bf16.mxu0 %v1092
  %1315 = vmatpush1.bf16.msra.mxu0 %v1091
  %1316 = vmatprep.subr.bf16.mxu0 %v1099
  %1317 = vmatpush1.bf16.msra.mxu0 %v1098
  %1318 = vmatprep.subr.bf16.mxu0 %v1106
  %1319 = vmatpush1.bf16.msra.mxu0 %v1105
  %1320 = vmatprep.subr.bf16.mxu0 %v1113
  %1321 = vmatpush1.bf16.msra.mxu0 %v1112
  %1322 = vmatprep.subr.bf16.mxu0 %v1120
  %1323 = vmatpush1.bf16.msra.mxu0 %v1119
  %1324 = vmatprep.subr.bf16.mxu0 %v1127
  %1325 = vmatpush1.bf16.msra.mxu0 %v1126
  %1326 = vmatprep.subr.bf16.mxu0 %v1134
  %1327 = vmatpush1.bf16.msra.mxu0 %v1133
  %1328 = vmatprep.subr.bf16.mxu0 %v1141
  %1329 = vmatpush1.bf16.msra.mxu0 %v1140
  %1330 = vmatprep.mubr.bf16.mxu0 %v515
  %1331 = vmatmul.mubr.bf16.gmra.mrb[0].mxu0 %v514
  %v1332 = vpop.f32.mrb[0].mxu0
  %v1333 = vadd.f32 %v657, %v1332
  %v1334 = vpop.f32.mrb[0].mxu0
  %v1335 = vadd.f32 %v661, %v1334
  %v1336 = vpop.f32.mrb[0].mxu0
  %v1337 = vpop.f32.mrb[0].mxu0
  %1338 = vdwg.mxu0
  %1339 = vmatprep.subr.bf16.mxu0 %v1038
  %1340 = vmatpush1.bf16.msra.mxu0 %v1037
  %1341 = vmatprep.subr.bf16.mxu0 %v1045
  %1342 = vmatpush1.bf16.msra.mxu0 %v1044
  %1343 = vmatprep.subr.bf16.mxu0 %v1052
  %1344 = vmatpush1.bf16.msra.mxu0 %v1051
  %1345 = vmatprep.subr.bf16.mxu0 %v1059
  %1346 = vmatpush1.bf16.msra.mxu0 %v1058
  %1347 = vmatprep.subr.bf16.mxu0 %v1066
  %1348 = vmatpush1.bf16.msra.mxu0 %v1065
  %1349 = vmatprep.subr.bf16.mxu0 %v1073
  %1350 = vmatpush1.bf16.msra.mxu0 %v1072
  %1351 = vmatprep.subr.bf16.mxu0 %v1080
  %1352 = vmatpush1.bf16.msra.mxu0 %v1079
  %1353 = vmatprep.subr.bf16.mxu0 %v1087
  %1354 = vmatpush1.bf16.msra.mxu0 %v1086
  %1355 = vmatprep.subr.bf16.mxu0 %v1094
  %1356 = vmatpush1.bf16.msra.mxu0 %v1093
  %1357 = vmatprep.subr.bf16.mxu0 %v1101
  %1358 = vmatpush1.bf16.msra.mxu0 %v1100
  %1359 = vmatprep.subr.bf16.mxu0 %v1108
  %1360 = vmatpush1.bf16.msra.mxu0 %v1107
  %1361 = vmatprep.subr.bf16.mxu0 %v1115
  %1362 = vmatpush1.bf16.msra.mxu0 %v1114
  %1363 = vmatprep.subr.bf16.mxu0 %v1122
  %1364 = vmatpush1.bf16.msra.mxu0 %v1121
  %1365 = vmatprep.subr.bf16.mxu0 %v1129
  %1366 = vmatpush1.bf16.msra.mxu0 %v1128
  %1367 = vmatprep.subr.bf16.mxu0 %v1136
  %1368 = vmatpush1.bf16.msra.mxu0 %v1135
  %1369 = vmatprep.subr.bf16.mxu0 %v1143
  %1370 = vmatpush1.bf16.msra.mxu0 %v1142
  %1371 = vmatprep.mubr.bf16.mxu0 %v515
  %1372 = vmatmul.mubr.bf16.gmra.mrb[0].mxu0 %v514
  %v1373 = vpop.f32.mrb[0].mxu0
  %v1374 = vadd.f32 %v665, %v1373
  %v1375 = vpop.f32.mrb[0].mxu0
  %v1376 = vadd.f32 %v669, %v1375
  %v1377 = vpop.f32.mrb[0].mxu0
  %v1378 = vpop.f32.mrb[0].mxu0
  %1379 = vdwg.mxu0
  %1380 = vmatprep.subr.bf16.mxu0 0
  %1381 = vmatpush1.bf16.msra.mxu0 %v1039
  %1382 = vmatprep.subr.bf16.mxu0 0
  %1383 = vmatpush1.bf16.msra.mxu0 %v1046
  %1384 = vmatprep.subr.bf16.mxu0 0
  %1385 = vmatpush1.bf16.msra.mxu0 %v1053
  %1386 = vmatprep.subr.bf16.mxu0 0
  %1387 = vmatpush1.bf16.msra.mxu0 %v1060
  %1388 = vmatprep.subr.bf16.mxu0 0
  %1389 = vmatpush1.bf16.msra.mxu0 %v1067
  %1390 = vmatprep.subr.bf16.mxu0 0
  %1391 = vmatpush1.bf16.msra.mxu0 %v1074
  %1392 = vmatprep.subr.bf16.mxu0 0
  %1393 = vmatpush1.bf16.msra.mxu0 %v1081
  %1394 = vmatprep.subr.bf16.mxu0 0
  %1395 = vmatpush1.bf16.msra.mxu0 %v1088
  %1396 = vmatprep.subr.bf16.mxu0 0
  %1397 = vmatpush1.bf16.msra.mxu0 %v1095
  %1398 = vmatprep.subr.bf16.mxu0 0
  %1399 = vmatpush1.bf16.msra.mxu0 %v1102
  %1400 = vmatprep.subr.bf16.mxu0 0
  %1401 = vmatpush1.bf16.msra.mxu0 %v1109
  %1402 = vmatprep.subr.bf16.mxu0 0
  %1403 = vmatpush1.bf16.msra.mxu0 %v1116
  %1404 = vmatprep.subr.bf16.mxu0 0
  %1405 = vmatpush1.bf16.msra.mxu0 %v1123
  %1406 = vmatprep.subr.bf16.mxu0 0
  %1407 = vmatpush1.bf16.msra.mxu0 %v1130
  %1408 = vmatprep.subr.bf16.mxu0 0
  %1409 = vmatpush1.bf16.msra.mxu0 %v1137
  %1410 = vmatprep.subr.bf16.mxu0 0
  %1411 = vmatpush1.bf16.msra.mxu0 %v1144
  %1412 = vmatprep.mubr.bf16.mxu0 %v515
  %1413 = vmatmul.mubr.bf16.gmra.mrb[0].mxu0 %v514
  %v1414 = vpop.f32.mrb[0].mxu0
  %v1415 = vadd.f32 %v673, %v1414
  %v1416 = vpop.f32.mrb[0].mxu0
  %v1417 = vpop.f32.mrb[0].mxu0
  %v1418 = vpop.f32.mrb[0].mxu0
  %1419 = vdwg.mxu0
  %v1420 = vtanh.pop %v1292
  %v1421 = vtanh.pop %v1294
  %v1422 = vtanh.pop %v1333
  %v1423 = vtanh.pop %v1335
  %v1424 = vtanh.pop %v1374
  %v1425 = vtanh.pop %v1376
  %v1426 = vtanh.pop %v1415
  %v1427 = vpack.c.bf16 %v1420, %v1420
  %v1428 = vpack.c.bf16 %v1421, %v1421
  %v1429 = vpack.c.bf16 %v1422, %v1422
  %v1430 = vpack.c.bf16 %v1423, %v1423
  %v1431 = vpack.c.bf16 %v1424, %v1424
  %v1432 = vpack.c.bf16 %v1425, %v1425
  %v1433 = vpack.c.bf16 %v1426, %v1426
  %v1441 = vunpack.c.l.b16 %v1427
  %v1442 = vunpack.c.l.b16 %v1428
  %v1443 = vunpack.c.l.b16 %v1429
  %v1444 = vunpack.c.l.b16 %v1430
  %v1445 = vunpack.c.l.b16 %v1431
  %v1446 = vunpack.c.l.b16 %v1432
  %v1447 = vunpack.c.l.b16 %v1433
  %v1448 = vpack.c.b16 %v1442, %v1441
  %v1449 = vpack.c.b16 %v1444, %v1443
  %v1450 = vpack.c.b16 %v1446, %v1445
  %v1451 = vpack.c.b16 %v1447, %v1447
  %1456 = vst [vmem:[%s9] sm:$0xff] %v1448
  %1457 = vst [vmem:[%s9 + $0x8] sm:$0xff] %v1449
  %1458 = vst [vmem:[%s9 + $0x10] sm:$0xff] %v1450
  %vm1459 = vcmask 125952
  %1460 = vst.msk [vmem:[%s9 + $0x18] sm:$0xf] %vm1459, %v1451
  // Predicated region
  $region38: #{generator_forward.1} parent=0 // pred_check
    _
  $region39: #{generator_forward.1} parent=0 // pred_check_branch
    %1462 = sbr.rel (0) target = $region41
  $region40: #{generator_forward.1} parent=0 // pred_region
    _
  $region41: #{generator_forward.1} parent=0 // pred_fallthru
    _
  // Predicated region
  $region42: #{generator_forward.1} parent=0 // pred_check
    _
  $region43: #{generator_forward.1} parent=0 // pred_check_branch
    %1464 = sbr.rel (0) target = $region45
  $region44: #{generator_forward.1} parent=0 // pred_region
    _
  $region45: #{generator_forward.1} parent=0 // pred_fallthru
    _

</llo_original>
